<compile_context>
chip_gen: v7x
topology: tpu7x:2x2x1
jax: 0.10.0
libtpu: 0.0.40
codegen_flags: <defaults>
</compile_context>

<pallas_src>
import jax
import jax.numpy as jnp
from jax.experimental import pallas as pl
from jax.experimental.pallas import tpu as pltpu

LANE = 128  # TPU vreg lane width


def _round_up(x, m):
    return (x + m - 1) // m * m


def qnet_kernel(x_ref, w1_ref, b1_ref, w2_ref, b2_ref, o_ref):
    x = x_ref[...]                      # (tm, K) f32, K = input_size (tiny)
    k_dim = x_ref.shape[1]

    # fc1 as K rank-1 updates on the VPU, exact f32 (an MXU matmul with K=4
    # would fill the 128/256-deep contraction with zeros — pure latency).
    h = x[:, 0:1] * w1_ref[0:1, :]
    for k in range(1, k_dim):
        h = h + x[:, k:k + 1] * w1_ref[k:k + 1, :]
    h = jnp.maximum(h + b1_ref[...], 0.0)          # f32 bias + ReLU (VPU)

    # fc2: bf16 operands on the MXU (K = 128 lane-dense), f32 accumulate;
    # bias add stays in f32 (v5e VPU has no bf16 datapath).
    out = jnp.dot(h.astype(jnp.bfloat16), w2_ref[...],
                  preferred_element_type=jnp.float32)
    o_ref[...] = (out + b2_ref[...]).astype(o_ref.dtype)


def prepare_qnet_params(w1, b1, w2, b2):
    """Pad / cast parameters ONCE (hoisted out of the per-step forward path).

    w1: [in, hid]; b1: [hid] or [1, hid]; w2: [hid, out]; b2: [out] or [1, out].
    Padded hidden lanes carry zero weights and zero bias, so they are exactly 0
    after ReLU and contribute exactly 0 through fc2.
    """
    in_size, hid = w1.shape
    out_size = w2.shape[1]
    hid_p = _round_up(hid, LANE)   # lane-dense hidden; do NOT pad to 256

    w1_p = jnp.zeros((in_size, hid_p), jnp.float32).at[:, :hid].set(
        jnp.asarray(w1, jnp.float32))
    b1_p = jnp.zeros((1, hid_p), jnp.float32).at[:, :hid].set(
        jnp.asarray(b1, jnp.float32).reshape(1, hid))
    w2_p = jnp.zeros((hid_p, out_size), jnp.bfloat16).at[:hid, :].set(
        jnp.asarray(w2, jnp.bfloat16))
    b2_p = jnp.asarray(b2, jnp.float32).reshape(1, out_size)
    return w1_p, b1_p, w2_p, b2_p


def _choose_batch_tile(B, block_b):
    """Balanced batch tiling: Bp never inflates to ~2x B, and B >= 16 always
    yields >=2 grid steps so both v7x TensorCores get work."""
    n_steps = pl.cdiv(B, block_b)
    if n_steps < 2 and B >= 16:
        n_steps = 2
    tm = _round_up(pl.cdiv(B, n_steps), 8)   # sublane multiple
    Bp = _round_up(B, tm)
    return tm, Bp


def qnet_forward(x, w1_p, b1_p, w2_p, b2_p, *, block_b=4096):
    """x: [B, in] (any float dtype); params are the pre-padded outputs of
    prepare_qnet_params().  Returns f32 [B, out]."""
    x = jnp.asarray(x, jnp.float32)
    B, in_size = x.shape
    hid_p = w1_p.shape[1]
    out_size = w2_p.shape[1]

    tm, Bp = _choose_batch_tile(B, block_b)
    x_p = x if Bp == B else jnp.zeros((Bp, in_size), jnp.float32).at[:B].set(x)

    out = pl.pallas_call(
        qnet_kernel,
        out_shape=jax.ShapeDtypeStruct((Bp, out_size), jnp.float32),
        grid_spec=pltpu.PrefetchScalarGridSpec(
            num_scalar_prefetch=0,
            grid=(Bp // tm,),
            in_specs=[
                pl.BlockSpec((tm, in_size), lambda i: (i, 0)),      # x tile (pipelined)
                pl.BlockSpec((in_size, hid_p), lambda i: (0, 0)),   # w1 (resident, f32)
                pl.BlockSpec((1, hid_p), lambda i: (0, 0)),         # b1 (resident, f32)
                pl.BlockSpec((hid_p, out_size), lambda i: (0, 0)),  # w2 (resident, bf16)
                pl.BlockSpec((1, out_size), lambda i: (0, 0)),      # b2 (resident, f32)
            ],
            out_specs=pl.BlockSpec((tm, out_size), lambda i: (i, 0)),  # unpadded N
        ),
        compiler_params=pltpu.CompilerParams(
            dimension_semantics=("parallel",)),  # shards batch axis on v7x dual-TC
    )(x_p, w1_p, b1_p, w2_p, b2_p)

    return out if Bp == B else out[:B]


qnet_forward_jit = jax.jit(qnet_forward, static_argnames=("block_b",))


def init_qnet_params(key, input_size, hidden_size, output_size):
    """Deterministic init mimicking torch.nn.Linear default (U[-1/sqrt(fan_in), +1/sqrt(fan_in)])."""
    k1, k2, k3, k4 = jax.random.split(key, 4)
    bound1 = 1.0 / jnp.sqrt(jnp.float32(input_size))
    bound2 = 1.0 / jnp.sqrt(jnp.float32(hidden_size))
    # stored as [in, out] (transposed relative to torch's [out, in])
    w1 = jax.random.uniform(k1, (input_size, hidden_size), jnp.float32, -bound1, bound1)
    b1 = jax.random.uniform(k2, (1, hidden_size), jnp.float32, -bound1, bound1)
    w2 = jax.random.uniform(k3, (hidden_size, output_size), jnp.float32, -bound2, bound2)
    b2 = jax.random.uniform(k4, (1, output_size), jnp.float32, -bound2, bound2)
    return w1, b1, w2, b2


if __name__ == "__main__":
    # Small shapes consistent with a DQN for a gym-like env (e.g. CartPole):
    # state_dim=4, hidden=32, n_actions=2
    input_size, hidden_size, output_size = 4, 32, 2

    key = jax.random.PRNGKey(0)
    kx, kp, kbig = jax.random.split(key, 3)
    w1, b1, w2, b2 = init_qnet_params(kp, input_size, hidden_size, output_size)

    # Pad / cast the weights ONCE (not per forward call).
    params = prepare_qnet_params(w1, b1, w2, b2)

    # --- small batch (acting path) ---
    batch = 2
    x = jax.random.normal(kx, (batch, input_size), jnp.float32)
    out = jax.block_until_ready(qnet_forward_jit(x, *params))

    ref = jnp.maximum(x @ w1 + b1, 0.0) @ w2 + b2  # f32 reference
    assert out.shape == (batch, output_size)
    # fc1 exact f32; only the fc2 operands are bf16 -> tight tolerance
    assert jnp.allclose(out, ref, atol=2e-2, rtol=2e-2), (out, ref)

    # --- larger batch (replay-buffer path) exercises the batch grid + parallel axis ---
    big_batch = 1024
    xb = jax.random.normal(kbig, (big_batch, input_size), jnp.float32)
    outb = jax.block_until_ready(qnet_forward_jit(xb, *params))
    refb = jnp.maximum(xb @ w1 + b1, 0.0) @ w2 + b2
    assert outb.shape == (big_batch, output_size)
    assert jnp.allclose(outb, refb, atol=2e-2, rtol=2e-2)

    print("KERNEL_OK")
</pallas_src>

<mosaic_0001>
module attributes {stable_mosaic.version = 11 : i64} {
  func.func @qnet_kernel(%arg0: i32, %arg1: memref<8x4xf32, #tpu.memory_space<vmem>>, %arg2: memref<4x128xf32, #tpu.memory_space<vmem>>, %arg3: memref<1x128xf32, #tpu.memory_space<vmem>>, %arg4: memref<128x2xbf16, #tpu.memory_space<vmem>>, %arg5: memref<1x2xf32, #tpu.memory_space<vmem>>, %arg6: memref<8x2xf32, #tpu.memory_space<vmem>>) attributes {dimension_semantics = [#tpu.dimension_semantics<parallel>], iteration_bounds = array<i64: 1>, scalar_prefetch = 0 : i64, scratch_operands = 0 : i64, tpu.core_type = #tpu.core_type<tc>, window_params = [{transform_indices = @transform_0, window_bounds = array<i64: 8, 4>}, {pipeline_mode = #tpu.pipeline_mode<synchronous>, transform_indices = @transform_1, window_bounds = array<i64: 4, 128>}, {pipeline_mode = #tpu.pipeline_mode<synchronous>, transform_indices = @transform_2, window_bounds = array<i64: 1, 128>}, {pipeline_mode = #tpu.pipeline_mode<synchronous>, transform_indices = @transform_3, window_bounds = array<i64: 128, 2>}, {pipeline_mode = #tpu.pipeline_mode<synchronous>, transform_indices = @transform_4, window_bounds = array<i64: 1, 2>}, {transform_indices = @transform_5, window_bounds = array<i64: 8, 2>}]} {
    %c0 = arith.constant 0 : index
    %c0_0 = arith.constant 0 : index
    %0 = vector.load %arg1[%c0, %c0_0] : memref<8x4xf32, #tpu.memory_space<vmem>>, vector<8x4xf32>
    %1 = vector.extract_strided_slice %0 {offsets = [0, 0], sizes = [8, 1], strides = [1, 1]} : vector<8x4xf32> to vector<8x1xf32>
    %c0_1 = arith.constant 0 : index
    %c0_2 = arith.constant 0 : index
    %2 = vector.load %arg2[%c0_1, %c0_2] : memref<4x128xf32, #tpu.memory_space<vmem>>, vector<1x128xf32>
    %3 = vector.broadcast %1 : vector<8x1xf32> to vector<8x128xf32>
    %4 = vector.broadcast %2 : vector<1x128xf32> to vector<8x128xf32>
    %5 = arith.mulf %3, %4 : vector<8x128xf32>
    %6 = vector.extract_strided_slice %0 {offsets = [0, 1], sizes = [8, 1], strides = [1, 1]} : vector<8x4xf32> to vector<8x1xf32>
    %c1 = arith.constant 1 : index
    %c0_3 = arith.constant 0 : index
    %7 = vector.load %arg2[%c1, %c0_3] : memref<4x128xf32, #tpu.memory_space<vmem>>, vector<1x128xf32>
    %8 = vector.broadcast %6 : vector<8x1xf32> to vector<8x128xf32>
    %9 = vector.broadcast %7 : vector<1x128xf32> to vector<8x128xf32>
    %10 = arith.mulf %8, %9 : vector<8x128xf32>
    %11 = arith.addf %5, %10 : vector<8x128xf32>
    %12 = vector.extract_strided_slice %0 {offsets = [0, 2], sizes = [8, 1], strides = [1, 1]} : vector<8x4xf32> to vector<8x1xf32>
    %c2 = arith.constant 2 : index
    %c0_4 = arith.constant 0 : index
    %13 = vector.load %arg2[%c2, %c0_4] : memref<4x128xf32, #tpu.memory_space<vmem>>, vector<1x128xf32>
    %14 = vector.broadcast %12 : vector<8x1xf32> to vector<8x128xf32>
    %15 = vector.broadcast %13 : vector<1x128xf32> to vector<8x128xf32>
    %16 = arith.mulf %14, %15 : vector<8x128xf32>
    %17 = arith.addf %11, %16 : vector<8x128xf32>
    %18 = vector.extract_strided_slice %0 {offsets = [0, 3], sizes = [8, 1], strides = [1, 1]} : vector<8x4xf32> to vector<8x1xf32>
    %c3 = arith.constant 3 : index
    %c0_5 = arith.constant 0 : index
    %19 = vector.load %arg2[%c3, %c0_5] : memref<4x128xf32, #tpu.memory_space<vmem>>, vector<1x128xf32>
    %20 = vector.broadcast %18 : vector<8x1xf32> to vector<8x128xf32>
    %21 = vector.broadcast %19 : vector<1x128xf32> to vector<8x128xf32>
    %22 = arith.mulf %20, %21 : vector<8x128xf32>
    %23 = arith.addf %17, %22 : vector<8x128xf32>
    %c0_6 = arith.constant 0 : index
    %c0_7 = arith.constant 0 : index
    %24 = vector.load %arg3[%c0_6, %c0_7] : memref<1x128xf32, #tpu.memory_space<vmem>>, vector<1x128xf32>
    %25 = vector.broadcast %24 : vector<1x128xf32> to vector<8x128xf32>
    %26 = arith.addf %23, %25 : vector<8x128xf32>
    %cst = arith.constant 0.000000e+00 : f32
    %27 = vector.broadcast %cst : f32 to vector<8x128xf32>
    %28 = arith.maximumf %26, %27 : vector<8x128xf32>
    %29 = arith.truncf %28 : vector<8x128xf32> to vector<8x128xbf16>
    %c0_8 = arith.constant 0 : index
    %c0_9 = arith.constant 0 : index
    %30 = vector.load %arg4[%c0_8, %c0_9] : memref<128x2xbf16, #tpu.memory_space<vmem>>, vector<128x2xbf16>
    %cst_10 = arith.constant dense<0.000000e+00> : vector<8x2xf32>
    %31 = tpu.matmul %29, %30, %cst_10 {dimension_numbers = #tpu.dot_dimension_numbers<[1], [0], [0], [1], [0, 0, 1, 1], [], []>} : vector<8x128xbf16>, vector<128x2xbf16>, vector<8x2xf32> -> vector<8x2xf32>
    %c0_11 = arith.constant 0 : index
    %c0_12 = arith.constant 0 : index
    %32 = vector.load %arg5[%c0_11, %c0_12] : memref<1x2xf32, #tpu.memory_space<vmem>>, vector<1x2xf32>
    %33 = vector.broadcast %32 : vector<1x2xf32> to vector<8x2xf32>
    %34 = arith.addf %31, %33 : vector<8x2xf32>
    %c0_13 = arith.constant 0 : index
    %c0_14 = arith.constant 0 : index
    %35 = vector.load %arg6[%c0_13, %c0_14] : memref<8x2xf32, #tpu.memory_space<vmem>>, vector<8x2xf32>
    tpu.vector_store %arg6[%c0_13, %c0_14], %34 {strides = array<i32>} : memref<8x2xf32, #tpu.memory_space<vmem>>, vector<8x2xf32>,
    return
  }
  func.func @transform_0(%arg0: i32) -> (i32, i32) {
    %c0_i32 = arith.constant 0 : i32
    %c0_i32_0 = arith.constant 0 : i32
    return %arg0, %c0_i32 : i32, i32
  }
  func.func @transform_1(%arg0: i32) -> (i32, i32) {
    %c0_i32 = arith.constant 0 : i32
    %c0_i32_0 = arith.constant 0 : i32
    %c0_i32_1 = arith.constant 0 : i32
    return %c0_i32, %c0_i32_0 : i32, i32
  }
  func.func @transform_2(%arg0: i32) -> (i32, i32) {
    %c0_i32 = arith.constant 0 : i32
    %c0_i32_0 = arith.constant 0 : i32
    %c0_i32_1 = arith.constant 0 : i32
    return %c0_i32, %c0_i32_0 : i32, i32
  }
  func.func @transform_3(%arg0: i32) -> (i32, i32) {
    %c0_i32 = arith.constant 0 : i32
    %c0_i32_0 = arith.constant 0 : i32
    %c0_i32_1 = arith.constant 0 : i32
    return %c0_i32, %c0_i32_0 : i32, i32
  }
  func.func @transform_4(%arg0: i32) -> (i32, i32) {
    %c0_i32 = arith.constant 0 : i32
    %c0_i32_0 = arith.constant 0 : i32
    %c0_i32_1 = arith.constant 0 : i32
    return %c0_i32, %c0_i32_0 : i32, i32
  }
  func.func @transform_5(%arg0: i32) -> (i32, i32) {
    %c0_i32 = arith.constant 0 : i32
    %c0_i32_0 = arith.constant 0 : i32
    return %arg0, %c0_i32 : i32, i32
  }
}

</mosaic_0001>

<llo_original>
// kernel: qnet_forward.1
$region0: #{qnet_forward.1}
  #allocation0 [shape = 'u32[]', space=smem, size = 0x4, offset = 0x4, fixed_abs, tag = 'smem constant byte address 0x4 - core index']
  #allocation1 [shape = 'u32[144,128]{1,0:T(1,128)}', space=vmem, size = 0x12000, scoped, tag = 'internal scratch']
  %s0 = inlined_call_operand.vmem [shape: f32[8,4], index: 0, kind: input, shape index: {}]
  %s1 = inlined_call_operand.vmem [shape: f32[4,128], index: 1, kind: input, shape index: {}]
  %s2 = inlined_call_operand.vmem [shape: f32[1,128], index: 2, kind: input, shape index: {}]
  %s3 = inlined_call_operand.vmem [shape: bf16[128,2], index: 3, kind: input, shape index: {}]
  %s4 = inlined_call_operand.vmem [shape: f32[1,2], index: 4, kind: input, shape index: {}]
  %s5 = inlined_call_operand.vmem [shape: f32[8,2], index: 5, kind: output, shape index: {}]
  %s6 = sld [smem:[#allocation0]]
  $region30: #{qnet_forward.1} parent=0
    _
  %s8 = ssub.s32 1, %s6
  %s9 = scalar_select 0, %s8, %s6
  // Predicated region
  $region2: #{qnet_forward.1} parent=0 // pred_check
    _
  $region3: #{qnet_forward.1} parent=0 // pred_check_branch
    %11 = sbr.rel (0) target = $region5
  $region4: #{qnet_forward.1} parent=0 // pred_region
    _
  $region5: #{qnet_forward.1} parent=0 // pred_fallthru
    _
  // Predicated region
  $region6: #{qnet_forward.1} parent=0 // pred_check
    _
  $region7: #{qnet_forward.1} parent=0 // pred_check_branch
    %13 = sbr.rel (0) target = $region9
  $region8: #{qnet_forward.1} parent=0 // pred_region
    _
  $region9: #{qnet_forward.1} parent=0 // pred_fallthru
    _
  // Predicated region
  $region10: #{qnet_forward.1} parent=0 // pred_check
    _
  $region11: #{qnet_forward.1} parent=0 // pred_check_branch
    %15 = sbr.rel (0) target = $region13
  $region12: #{qnet_forward.1} parent=0 // pred_region
    _
  $region13: #{qnet_forward.1} parent=0 // pred_fallthru
    _
  // Predicated region
  $region14: #{qnet_forward.1} parent=0 // pred_check
    _
  $region15: #{qnet_forward.1} parent=0 // pred_check_branch
    %17 = sbr.rel (0) target = $region17
  $region16: #{qnet_forward.1} parent=0 // pred_region
    _
  $region17: #{qnet_forward.1} parent=0 // pred_fallthru
    _
  // Predicated region
  $region18: #{qnet_forward.1} parent=0 // pred_check
    _
  $region19: #{qnet_forward.1} parent=0 // pred_check_branch
    %19 = sbr.rel (0) target = $region21
  $region20: #{qnet_forward.1} parent=0 // pred_region
    _
  $region21: #{qnet_forward.1} parent=0 // pred_fallthru
    _
  %v21 = vld [vmem:[%s0] sm:$0xff]
  %v22 = vld [vmem:[%s1] sm:$0x1]
  %24 = vset.pattern.permute.xlu0 0
  %25 = vperm.xlu0 %24, %v21
  %v26 = vpop.permute.xlu0 %25
  %v28 = vlaneseq
  %v29 = vshrl.u32 %v28, 7
  %v30 = vsub.s32 0, %v29
  %v31 = vrot.slane %v22, %v30
  %v32 = vmul.f32 %v26, %v31
  %v33 = vld [vmem:[%s1 + $0x1] sm:$0x1]
  %34 = vset.pattern.permute.xlu0 1
  %35 = vperm.xlu0 %34, %v21
  %v36 = vpop.permute.xlu0 %35
  %v38 = vlaneseq
  %v39 = vshrl.u32 %v38, 7
  %v40 = vsub.s32 0, %v39
  %v41 = vrot.slane %v33, %v40
  %v42 = vmul.f32 %v36, %v41
  %v43 = vadd.f32 %v32, %v42
  %v44 = vld [vmem:[%s1 + $0x2] sm:$0x1]
  %45 = vset.pattern.permute.xlu0 2
  %46 = vperm.xlu0 %45, %v21
  %v47 = vpop.permute.xlu0 %46
  %v49 = vlaneseq
  %v50 = vshrl.u32 %v49, 7
  %v51 = vsub.s32 0, %v50
  %v52 = vrot.slane %v44, %v51
  %v53 = vmul.f32 %v47, %v52
  %v54 = vadd.f32 %v43, %v53
  %v55 = vld [vmem:[%s1 + $0x3] sm:$0x1]
  %56 = vset.pattern.permute.xlu0 3
  %57 = vperm.xlu0 %56, %v21
  %v58 = vpop.permute.xlu0 %57
  %v60 = vlaneseq
  %v61 = vshrl.u32 %v60, 7
  %v62 = vsub.s32 0, %v61
  %v63 = vrot.slane %v55, %v62
  %v64 = vmul.f32 %v58, %v63
  %v65 = vadd.f32 %v54, %v64
  %v66 = vld [vmem:[%s2] sm:$0x1]
  %v68 = vlaneseq
  %v69 = vshrl.u32 %v68, 7
  %v70 = vsub.s32 0, %v69
  %v71 = vrot.slane %v66, %v70
  %v73 = vadd.f32 %v65, %v71
  %v74 = vmax.f32 %v73, 0.0
  %v75 = vpack.c.bf16 %v74, %v74
  %v76 = vld [vmem:[%s3] sm:$0xf]
  %v77 = vld [vmem:[%s3 + $0x4] sm:$0xf]
  %v78 = vld [vmem:[%s3 + $0x8] sm:$0xf]
  %v79 = vld [vmem:[%s3 + $0xc] sm:$0xf]
  %v80 = vld [vmem:[%s3 + $0x10] sm:$0xf]
  %v81 = vld [vmem:[%s3 + $0x14] sm:$0xf]
  %v82 = vld [vmem:[%s3 + $0x18] sm:$0xf]
  %v83 = vld [vmem:[%s3 + $0x1c] sm:$0xf]
  %v84 = vld [vmem:[%s3 + $0x20] sm:$0xf]
  %v85 = vld [vmem:[%s3 + $0x24] sm:$0xf]
  %v86 = vld [vmem:[%s3 + $0x28] sm:$0xf]
  %v87 = vld [vmem:[%s3 + $0x2c] sm:$0xf]
  %v88 = vld [vmem:[%s3 + $0x30] sm:$0xf]
  %v89 = vld [vmem:[%s3 + $0x34] sm:$0xf]
  %v90 = vld [vmem:[%s3 + $0x38] sm:$0xf]
  %v91 = vld [vmem:[%s3 + $0x3c] sm:$0xf]
  %v92 = vld [vmem:[%s4] sm:$0x1]
  %v94 = vlaneseq
  %v95 = vshrl.u32 %v94, 7
  %v96 = vsub.s32 0, %v95
  %v97 = vrot.slane %v92, %v96
  %v115 = vunpack.c.l.b16 %v76
  %v116 = vunpack.c.l.b16 %v77
  %v117 = vunpack.c.l.b16 %v78
  %v118 = vunpack.c.l.b16 %v79
  %v119 = vunpack.c.l.b16 %v80
  %v120 = vunpack.c.l.b16 %v81
  %v121 = vunpack.c.l.b16 %v82
  %v122 = vunpack.c.l.b16 %v83
  %v123 = vunpack.c.l.b16 %v84
  %v124 = vunpack.c.l.b16 %v85
  %v125 = vunpack.c.l.b16 %v86
  %v126 = vunpack.c.l.b16 %v87
  %v127 = vunpack.c.l.b16 %v88
  %v128 = vunpack.c.l.b16 %v89
  %v129 = vunpack.c.l.b16 %v90
  %v130 = vunpack.c.l.b16 %v91
  %v131 = vpack.c.b16 %v116, %v115
  %v132 = vpack.c.b16 %v118, %v117
  %v133 = vpack.c.b16 %v120, %v119
  %v134 = vpack.c.b16 %v122, %v121
  %v135 = vpack.c.b16 %v124, %v123
  %v136 = vpack.c.b16 %v126, %v125
  %v137 = vpack.c.b16 %v128, %v127
  %v138 = vpack.c.b16 %v130, %v129
  %147 = vmatprep.subr.bf16.mxu0 0
  %148 = vmatpush1.bf16.msra.mxu0 %v131
  %149 = vmatprep.subr.bf16.mxu0 0
  %150 = vmatpush1.bf16.msra.mxu0 %v132
  %151 = vmatprep.subr.bf16.mxu0 0
  %152 = vmatpush1.bf16.msra.mxu0 %v133
  %153 = vmatprep.subr.bf16.mxu0 0
  %154 = vmatpush1.bf16.msra.mxu0 %v134
  %155 = vmatprep.subr.bf16.mxu0 0
  %156 = vmatpush1.bf16.msra.mxu0 %v135
  %157 = vmatprep.subr.bf16.mxu0 0
  %158 = vmatpush1.bf16.msra.mxu0 %v136
  %159 = vmatprep.subr.bf16.mxu0 0
  %160 = vmatpush1.bf16.msra.mxu0 %v137
  %161 = vmatprep.subr.bf16.mxu0 0
  %162 = vmatpush1.bf16.msra.mxu0 %v138
  %163 = vmatprep.subr.bf16.mxu0 0
  %164 = vmatpush1.bf16.msra.mxu0 0
  %165 = vmatprep.subr.bf16.mxu0 0
  %166 = vmatpush1.bf16.msra.mxu0 0
  %167 = vmatprep.subr.bf16.mxu0 0
  %168 = vmatpush1.bf16.msra.mxu0 0
  %169 = vmatprep.subr.bf16.mxu0 0
  %170 = vmatpush1.bf16.msra.mxu0 0
  %171 = vmatprep.subr.bf16.mxu0 0
  %172 = vmatpush1.bf16.msra.mxu0 0
  %173 = vmatprep.subr.bf16.mxu0 0
  %174 = vmatpush1.bf16.msra.mxu0 0
  %175 = vmatprep.subr.bf16.mxu0 0
  %176 = vmatpush1.bf16.msra.mxu0 0
  %177 = vmatprep.subr.bf16.mxu0 0
  %178 = vmatpush1.bf16.msra.mxu0 0
  %179 = vmatprep.mubr.bf16.mxu0 0
  %180 = vmatmul.mubr.bf16.gmra.mrb[0].mxu0 %v75
  %v181 = vpop.f32.mrb[0].mxu0
  %v182 = vadd.f32 %v97, %v181
  %v183 = vpop.f32.mrb[0].mxu0
  %v184 = vpop.f32.mrb[0].mxu0
  %v185 = vpop.f32.mrb[0].mxu0
  %186 = vdwg.mxu0
  %vm187 = vcmask 15360
  %188 = vst.msk [vmem:[%s5] sm:$0xff] %vm187, %v182
  // Predicated region
  $region22: #{qnet_forward.1} parent=0 // pred_check
    _
  $region23: #{qnet_forward.1} parent=0 // pred_check_branch
    %190 = sbr.rel (0) target = $region25
  $region24: #{qnet_forward.1} parent=0 // pred_region
    _
  $region25: #{qnet_forward.1} parent=0 // pred_fallthru
    _
  // Predicated region
  $region26: #{qnet_forward.1} parent=0 // pred_check
    _
  $region27: #{qnet_forward.1} parent=0 // pred_check_branch
    %192 = sbr.rel (0) target = $region29
  $region28: #{qnet_forward.1} parent=0 // pred_region
    _
  $region29: #{qnet_forward.1} parent=0 // pred_fallthru
    _

</llo_original>
